<compile_context>
chip_gen: v7x
topology: tpu7x:2x2x1
jax: 0.10.0
libtpu: 0.0.40
codegen_flags: <defaults>
</compile_context>

<pallas_src>
import functools

import jax
import jax.numpy as jnp
from jax import lax
from jax.experimental import pallas as pl
from jax.experimental.pallas import tpu as pltpu

SCALE = 5.0
EPS = 1e-12  # matches the F.normalize clamp used by sentence_transformers cos_sim
_DN = (((1,), (1,)), ((), ()))  # contract last dim of both operands (no transpose)


def consistency_loss_kernel(a_ref, b_ref, ta_ref, tb_ref,
                            a_inv_ref, ta_inv_ref, b_inv_ref, tb_inv_ref,
                            out_ref):
    j = pl.program_id(1)

    # The output block (8, TM) is the lane-dense accumulator over the
    # "arbitrary" j (column-tile) axis; zero it when the column loop starts.
    @pl.when(j == 0)
    def _init():
        out_ref[...] = jnp.zeros_like(out_ref)

    # Raw (un-normalized) similarity tiles, contraction over D, f32 accumulate.
    raw_s = lax.dot_general(a_ref[...], b_ref[...], _DN,
                            preferred_element_type=jnp.float32)   # (TN, TM)
    raw_t = lax.dot_general(ta_ref[...], tb_ref[...], _DN,
                            preferred_element_type=jnp.float32)   # (TN, TM)

    # Deferred normalization: rescale by the outer product of the precomputed
    # f32 inverse row norms (streamed side inputs, no in-kernel norm work).
    diff = (raw_s * a_inv_ref[...] * b_inv_ref[...]
            - raw_t * ta_inv_ref[...] * tb_inv_ref[...])
    sq = diff * diff

    tn, tm = sq.shape
    # Fold TN rows into 8 sublanes with full-vreg adds (no XLU cross-sublane
    # reduce, no masked 1-sublane store); the final collapse happens in the
    # wrapper on the tiny (num_i*8, TM) output.  SCALE^2 and the 1/(N*M) mean
    # are also folded into the wrapper's final scalar.
    out_ref[...] += jnp.sum(sq.reshape(tn // 8, 8, tm), axis=0)


def _round_up(x: int, m: int) -> int:
    return ((x + m - 1) // m) * m


def _inv_norms(x_f32):
    """Inverse L2 row norms, f32, clamped like F.normalize (eps=1e-12)."""
    ss = jnp.sum(x_f32 * x_f32, axis=-1, keepdims=True)
    return lax.rsqrt(jnp.maximum(ss, EPS * EPS))


def _choose_tiles(n: int, m: int, d: int, itemsize: int):
    """Pick (tn, tm, d_pad) against an explicit VMEM budget."""
    d_pad = _round_up(d, 128)
    tn = min(512, _round_up(n, 8))      # sublane-aligned row tile
    tm = min(512, _round_up(m, 128))    # lane-aligned column tile
    # Snap large tiles to multiples of 256 (v6e/v7x MXU is 2x256x256); the
    # 128-multiples that fall out for small shapes are fine on v5e too.
    if tn > 256:
        tn = (tn // 256) * 256
    if tm > 256:
        tm = (tm // 256) * 256

    def vmem_bytes(tn_, tm_):
        stream = 2 * 2 * (tn_ + tm_) * d_pad * itemsize   # a,b,ta,tb double-buffered
        norms = 2 * 2 * (tn_ + tm_) * 4                   # inverse-norm side inputs
        out = 2 * 8 * tm_ * 4                             # (8, TM) output block
        temps = 6 * tn_ * tm_ * 4                         # f32 matmul/diff temporaries
        return stream + norms + out + temps

    budget = 36 * 2**20  # headroom on v7x (64 MiB physical VMEM per TC)
    while vmem_bytes(tn, tm) > budget and tn > 8:
        tn = max(8, _round_up(tn // 2, 8))
    while vmem_bytes(tn, tm) > budget and tm > 128:
        tm = max(128, _round_up(tm // 2, 128))

    # v7x megacore: ensure the "parallel" row axis has >= 2 iterations so both
    # TensorCores get work; only split when halves still amortize step overhead.
    if _round_up(n, tn) // tn < 2 and tn >= 128:
        tn = max(8, _round_up(tn // 2, 8))

    return tn, tm, d_pad, vmem_bytes(tn, tm)


@functools.partial(jax.jit, static_argnames=("scale", "compute_dtype"))
def multiple_consistency_loss(emb_a, emb_b, teacher_a, teacher_b, *,
                              scale=SCALE, compute_dtype=jnp.bfloat16):
    """emb_a: (N, D), emb_b: (M, D), teacher_a: (N, D), teacher_b: (M, D)."""
    n, d = emb_a.shape
    m, d_b = emb_b.shape
    assert d == d_b and teacher_a.shape == emb_a.shape and teacher_b.shape == emb_b.shape

    itemsize = jnp.dtype(compute_dtype).itemsize
    tn, tm, d_pad, vmem_est = _choose_tiles(n, m, d, itemsize)
    n_pad = _round_up(n, tn)
    m_pad = _round_up(m, tm)
    num_i = n_pad // tn
    num_j = m_pad // tm

    def pad(x, rows):
        r, c = x.shape
        return jnp.pad(x.astype(jnp.float32), ((0, rows - r), (0, d_pad - c)))

    a32, b32 = pad(emb_a, n_pad), pad(emb_b, m_pad)
    ta32, tb32 = pad(teacher_a, n_pad), pad(teacher_b, m_pad)

    # f32 inverse row norms, computed ONCE in the wrapper (not per grid step).
    a_inv, ta_inv = _inv_norms(a32), _inv_norms(ta32)      # (n_pad, 1)
    b_inv, tb_inv = _inv_norms(b32).T, _inv_norms(tb32).T  # (1, m_pad)

    # bf16 (default) storage for the streamed embedding tiles: half the HBM
    # traffic and native-rate MXU; all norm / rescale / MSE math stays f32.
    a, b = a32.astype(compute_dtype), b32.astype(compute_dtype)
    ta, tb = ta32.astype(compute_dtype), tb32.astype(compute_dtype)

    grid_spec = pltpu.PrefetchScalarGridSpec(
        num_scalar_prefetch=0,
        grid=(num_i, num_j),
        in_specs=[
            pl.BlockSpec((tn, d_pad), lambda i, j: (i, 0)),   # a       (row-resident)
            pl.BlockSpec((tm, d_pad), lambda i, j: (j, 0)),   # b       (streamed)
            pl.BlockSpec((tn, d_pad), lambda i, j: (i, 0)),   # teacher_a
            pl.BlockSpec((tm, d_pad), lambda i, j: (j, 0)),   # teacher_b
            pl.BlockSpec((tn, 1), lambda i, j: (i, 0)),       # a inverse norms
            pl.BlockSpec((tn, 1), lambda i, j: (i, 0)),       # teacher_a inverse norms
            pl.BlockSpec((1, tm), lambda i, j: (0, j)),       # b inverse norms
            pl.BlockSpec((1, tm), lambda i, j: (0, j)),       # teacher_b inverse norms
        ],
        out_specs=pl.BlockSpec((8, tm), lambda i, j: (i, 0)),
    )

    partials = pl.pallas_call(
        consistency_loss_kernel,
        out_shape=jax.ShapeDtypeStruct((num_i * 8, tm), jnp.float32),
        grid_spec=grid_spec,
        compiler_params=pltpu.CompilerParams(
            dimension_semantics=("parallel", "arbitrary"),
            vmem_limit_bytes=int(min(48 * 2**20, max(16 * 2**20, 2 * vmem_est)))),
    )(a, b, ta, tb, a_inv, ta_inv, b_inv, tb_inv)

    # Fold SCALE^2 and the mean into one scalar op; divide by the TRUE N*M.
    return (scale * scale) * jnp.sum(partials) / (n * m)


def reference_loss(emb_a, emb_b, teacher_a, teacher_b, scale=SCALE):
    """Pure-JAX mirror of the PyTorch module (cos_sim * scale, then MSE)."""
    def cos(a, b):
        a = a.astype(jnp.float32)
        b = b.astype(jnp.float32)
        an = a / jnp.maximum(jnp.sqrt(jnp.sum(a * a, -1, keepdims=True)), EPS)
        bn = b / jnp.maximum(jnp.sqrt(jnp.sum(b * b, -1, keepdims=True)), EPS)
        return jnp.dot(an, bn.T, preferred_element_type=jnp.float32)
    s = cos(emb_a, emb_b) * scale
    ts = cos(teacher_a, teacher_b) * scale
    return jnp.mean((s - ts) ** 2)


if __name__ == "__main__":
    key = jax.random.PRNGKey(0)
    k_feat_a, k_feat_p, k_wm, k_wt = jax.random.split(key, 4)

    batch = 8        # number of (anchor, positive) sentence pairs
    d_in = 64        # pooled token feature dim fed to the "encoder"
    d_emb = 32       # sentence embedding dim

    # Two sentence_features entries: anchors and positives (pooled features).
    feats_anchor = jax.random.normal(k_feat_a, (batch, d_in), dtype=jnp.float32)
    feats_pos = jax.random.normal(k_feat_p, (batch, d_in), dtype=jnp.float32)

    # Deterministic "encoder" parameters (learner vs frozen teacher).
    # TODO(synk): the SentenceTransformer encoders are modeled as linear
    # projections; the real transformer stacks are out of scope for this kernel.
    w_model = jax.random.normal(k_wm, (d_in, d_emb), dtype=jnp.float32) / jnp.sqrt(d_in)
    w_teacher = jax.random.normal(k_wt, (d_in, d_emb), dtype=jnp.float32) / jnp.sqrt(d_in)

    # reps = [model(f)['sentence_embedding'] for f in sentence_features]
    reps = [feats_anchor @ w_model, feats_pos @ w_model]
    teacher_reps = [feats_anchor @ w_teacher, feats_pos @ w_teacher]

    embeddings_a = reps[0]                                   # (N, D)
    embeddings_b = jnp.concatenate(reps[1:], axis=0)         # (M, D)
    teacher_a = teacher_reps[0]                              # (N, D)
    teacher_b = jnp.concatenate(teacher_reps[1:], axis=0)    # (M, D)

    # NOTE: the teacher is frozen; in a training loop teacher_a/teacher_b (or
    # the whole teacher score matrix) can be precomputed once and reused.
    ref = reference_loss(embeddings_a, embeddings_b, teacher_a, teacher_b)

    # f32 compute path: matches the reference tightly.
    loss_f32 = multiple_consistency_loss(embeddings_a, embeddings_b,
                                         teacher_a, teacher_b,
                                         compute_dtype=jnp.float32)
    loss_f32 = jax.block_until_ready(loss_f32)
    assert jnp.allclose(loss_f32, ref, rtol=1e-4, atol=1e-4), (loss_f32, ref)

    # Default bf16 compute path (native-rate MXU, half the HBM traffic): the
    # matmuls run in bf16, so the tolerance is relaxed accordingly.
    loss_bf16 = multiple_consistency_loss(embeddings_a, embeddings_b,
                                          teacher_a, teacher_b)
    loss_bf16 = jax.block_until_ready(loss_bf16)
    assert jnp.allclose(loss_bf16, ref, rtol=1e-1, atol=5e-2), (loss_bf16, ref)

    print("KERNEL_OK")
</pallas_src>

<mosaic_0001>
module attributes {stable_mosaic.version = 11 : i64} {
  func.func @consistency_loss_kernel(%arg0: i32, %arg1: i32, %arg2: memref<8x128xf32, #tpu.memory_space<vmem>>, %arg3: memref<128x128xf32, #tpu.memory_space<vmem>>, %arg4: memref<8x128xf32, #tpu.memory_space<vmem>>, %arg5: memref<128x128xf32, #tpu.memory_space<vmem>>, %arg6: memref<8x1xf32, #tpu.memory_space<vmem>>, %arg7: memref<8x1xf32, #tpu.memory_space<vmem>>, %arg8: memref<1x128xf32, #tpu.memory_space<vmem>>, %arg9: memref<1x128xf32, #tpu.memory_space<vmem>>, %arg10: memref<8x128xf32, #tpu.memory_space<vmem>>) attributes {dimension_semantics = [#tpu.dimension_semantics<parallel>, #tpu.dimension_semantics<arbitrary>], iteration_bounds = array<i64: 1, 1>, scalar_prefetch = 0 : i64, scratch_operands = 0 : i64, tpu.core_type = #tpu.core_type<tc>, window_params = [{transform_indices = @transform_0, window_bounds = array<i64: 8, 128>}, {transform_indices = @transform_1, window_bounds = array<i64: 128, 128>}, {transform_indices = @transform_2, window_bounds = array<i64: 8, 128>}, {transform_indices = @transform_3, window_bounds = array<i64: 128, 128>}, {transform_indices = @transform_4, window_bounds = array<i64: 8, 1>}, {transform_indices = @transform_5, window_bounds = array<i64: 8, 1>}, {transform_indices = @transform_6, window_bounds = array<i64: 1, 128>}, {transform_indices = @transform_7, window_bounds = array<i64: 1, 128>}, {transform_indices = @transform_8, window_bounds = array<i64: 8, 128>}]} {
    %c0_i32 = arith.constant 0 : i32
    %0 = arith.cmpi eq, %arg1, %c0_i32 : i32
    %1 = arith.extui %0 : i1 to i32
    %c0_i32_0 = arith.constant 0 : i32
    %2 = arith.cmpi ne, %1, %c0_i32_0 : i32
    scf.if %2 {
      %cst_22 = arith.constant 0.000000e+00 : f32
      %28 = vector.broadcast %cst_22 : f32 to vector<8x128xf32>
      %c0_23 = arith.constant 0 : index
      %c0_24 = arith.constant 0 : index
      %29 = vector.load %arg10[%c0_23, %c0_24] : memref<8x128xf32, #tpu.memory_space<vmem>>, vector<8x128xf32>
      tpu.vector_store %arg10[%c0_23, %c0_24], %28 {strides = array<i32>} : memref<8x128xf32, #tpu.memory_space<vmem>>, vector<8x128xf32>,
    } else {
    }
    %c0 = arith.constant 0 : index
    %c0_1 = arith.constant 0 : index
    %3 = vector.load %arg2[%c0, %c0_1] : memref<8x128xf32, #tpu.memory_space<vmem>>, vector<8x128xf32>
    %c0_2 = arith.constant 0 : index
    %c0_3 = arith.constant 0 : index
    %4 = vector.load %arg3[%c0_2, %c0_3] : memref<128x128xf32, #tpu.memory_space<vmem>>, vector<128x128xf32>
    %cst = arith.constant dense<0.000000e+00> : vector<8x128xf32>
    %5 = tpu.matmul %3, %4, %cst {dimension_numbers = #tpu.dot_dimension_numbers<[1], [1], [0], [0], [0, 0, 1, 0], [], []>} : vector<8x128xf32>, vector<128x128xf32>, vector<8x128xf32> -> vector<8x128xf32>
    %c0_4 = arith.constant 0 : index
    %c0_5 = arith.constant 0 : index
    %6 = vector.load %arg4[%c0_4, %c0_5] : memref<8x128xf32, #tpu.memory_space<vmem>>, vector<8x128xf32>
    %c0_6 = arith.constant 0 : index
    %c0_7 = arith.constant 0 : index
    %7 = vector.load %arg5[%c0_6, %c0_7] : memref<128x128xf32, #tpu.memory_space<vmem>>, vector<128x128xf32>
    %cst_8 = arith.constant dense<0.000000e+00> : vector<8x128xf32>
    %8 = tpu.matmul %6, %7, %cst_8 {dimension_numbers = #tpu.dot_dimension_numbers<[1], [1], [0], [0], [0, 0, 1, 0], [], []>} : vector<8x128xf32>, vector<128x128xf32>, vector<8x128xf32> -> vector<8x128xf32>
    %c0_9 = arith.constant 0 : index
    %c0_10 = arith.constant 0 : index
    %9 = vector.load %arg6[%c0_9, %c0_10] : memref<8x1xf32, #tpu.memory_space<vmem>>, vector<8x1xf32>
    %10 = vector.broadcast %9 : vector<8x1xf32> to vector<8x128xf32>
    %11 = arith.mulf %5, %10 : vector<8x128xf32>
    %c0_11 = arith.constant 0 : index
    %c0_12 = arith.constant 0 : index
    %12 = vector.load %arg8[%c0_11, %c0_12] : memref<1x128xf32, #tpu.memory_space<vmem>>, vector<1x128xf32>
    %13 = vector.broadcast %12 : vector<1x128xf32> to vector<8x128xf32>
    %14 = arith.mulf %11, %13 : vector<8x128xf32>
    %c0_13 = arith.constant 0 : index
    %c0_14 = arith.constant 0 : index
    %15 = vector.load %arg7[%c0_13, %c0_14] : memref<8x1xf32, #tpu.memory_space<vmem>>, vector<8x1xf32>
    %16 = vector.broadcast %15 : vector<8x1xf32> to vector<8x128xf32>
    %17 = arith.mulf %8, %16 : vector<8x128xf32>
    %c0_15 = arith.constant 0 : index
    %c0_16 = arith.constant 0 : index
    %18 = vector.load %arg9[%c0_15, %c0_16] : memref<1x128xf32, #tpu.memory_space<vmem>>, vector<1x128xf32>
    %19 = vector.broadcast %18 : vector<1x128xf32> to vector<8x128xf32>
    %20 = arith.mulf %17, %19 : vector<8x128xf32>
    %21 = arith.subf %14, %20 : vector<8x128xf32>
    %22 = arith.mulf %21, %21 : vector<8x128xf32>
    %c0_17 = arith.constant 0 : index
    %c0_18 = arith.constant 0 : index
    %23 = vector.load %arg10[%c0_17, %c0_18] : memref<8x128xf32, #tpu.memory_space<vmem>>, vector<8x128xf32>
    %24 = vector.shape_cast %22 : vector<8x128xf32> to vector<1x8x128xf32>
    %cst_19 = arith.constant dense<0.000000e+00> : vector<8x128xf32>
    %25 = vector.multi_reduction <add>, %24, %cst_19 [0] : vector<1x8x128xf32> to vector<8x128xf32>
    %26 = arith.addf %23, %25 : vector<8x128xf32>
    %c0_20 = arith.constant 0 : index
    %c0_21 = arith.constant 0 : index
    %27 = vector.load %arg10[%c0_20, %c0_21] : memref<8x128xf32, #tpu.memory_space<vmem>>, vector<8x128xf32>
    tpu.vector_store %arg10[%c0_20, %c0_21], %26 {strides = array<i32>} : memref<8x128xf32, #tpu.memory_space<vmem>>, vector<8x128xf32>,
    return
  }
  func.func @transform_0(%arg0: i32, %arg1: i32) -> (i32, i32) {
    %c0_i32 = arith.constant 0 : i32
    %c0_i32_0 = arith.constant 0 : i32
    return %arg0, %c0_i32 : i32, i32
  }
  func.func @transform_1(%arg0: i32, %arg1: i32) -> (i32, i32) {
    %c0_i32 = arith.constant 0 : i32
    %c0_i32_0 = arith.constant 0 : i32
    return %arg1, %c0_i32 : i32, i32
  }
  func.func @transform_2(%arg0: i32, %arg1: i32) -> (i32, i32) {
    %c0_i32 = arith.constant 0 : i32
    %c0_i32_0 = arith.constant 0 : i32
    return %arg0, %c0_i32 : i32, i32
  }
  func.func @transform_3(%arg0: i32, %arg1: i32) -> (i32, i32) {
    %c0_i32 = arith.constant 0 : i32
    %c0_i32_0 = arith.constant 0 : i32
    return %arg1, %c0_i32 : i32, i32
  }
  func.func @transform_4(%arg0: i32, %arg1: i32) -> (i32, i32) {
    %c0_i32 = arith.constant 0 : i32
    %c0_i32_0 = arith.constant 0 : i32
    return %arg0, %c0_i32 : i32, i32
  }
  func.func @transform_5(%arg0: i32, %arg1: i32) -> (i32, i32) {
    %c0_i32 = arith.constant 0 : i32
    %c0_i32_0 = arith.constant 0 : i32
    return %arg0, %c0_i32 : i32, i32
  }
  func.func @transform_6(%arg0: i32, %arg1: i32) -> (i32, i32) {
    %c0_i32 = arith.constant 0 : i32
    %c0_i32_0 = arith.constant 0 : i32
    return %c0_i32, %arg1 : i32, i32
  }
  func.func @transform_7(%arg0: i32, %arg1: i32) -> (i32, i32) {
    %c0_i32 = arith.constant 0 : i32
    %c0_i32_0 = arith.constant 0 : i32
    return %c0_i32, %arg1 : i32, i32
  }
  func.func @transform_8(%arg0: i32, %arg1: i32) -> (i32, i32) {
    %c0_i32 = arith.constant 0 : i32
    %c0_i32_0 = arith.constant 0 : i32
    return %arg0, %c0_i32 : i32, i32
  }
}

</mosaic_0001>

<llo_original>
// kernel: multiple_consistency_loss.1
$region0: #{multiple_consistency_loss.1}
  #allocation0 [shape = 'u32[]', space=smem, size = 0x4, offset = 0x4, fixed_abs, tag = 'smem constant byte address 0x4 - core index']
  #allocation1 [shape = 'u32[144,128]{1,0:T(1,128)}', space=vmem, size = 0x12000, scoped, tag = 'internal scratch']
  %s0 = inlined_call_operand.vmem [shape: f32[8,128], index: 0, kind: input, shape index: {}]
  %s1 = inlined_call_operand.vmem [shape: f32[128,128], index: 1, kind: input, shape index: {}]
  %s2 = inlined_call_operand.vmem [shape: f32[8,128], index: 2, kind: input, shape index: {}]
  %s3 = inlined_call_operand.vmem [shape: f32[128,128], index: 3, kind: input, shape index: {}]
  %s4 = inlined_call_operand.vmem [shape: f32[8,1], index: 4, kind: input, shape index: {}]
  %s5 = inlined_call_operand.vmem [shape: f32[8,1], index: 5, kind: input, shape index: {}]
  %s6 = inlined_call_operand.vmem [shape: f32[1,128], index: 6, kind: input, shape index: {}]
  %s7 = inlined_call_operand.vmem [shape: f32[1,128], index: 7, kind: input, shape index: {}]
  %s8 = inlined_call_operand.vmem [shape: f32[8,128], index: 8, kind: output, shape index: {}]
  %s9 = sld [smem:[#allocation0]]
  $region46: #{multiple_consistency_loss.1} parent=0
    _
  %s11 = ssub.s32 1, %s9
  %s12 = scalar_select 0, %s11, %s9
  // Predicated region
  $region2: #{multiple_consistency_loss.1} parent=0 // pred_check
    _
  $region3: #{multiple_consistency_loss.1} parent=0 // pred_check_branch
    %14 = sbr.rel (0) target = $region5
  $region4: #{multiple_consistency_loss.1} parent=0 // pred_region
    _
  $region5: #{multiple_consistency_loss.1} parent=0 // pred_fallthru
    _
  // Predicated region
  $region6: #{multiple_consistency_loss.1} parent=0 // pred_check
    _
  $region7: #{multiple_consistency_loss.1} parent=0 // pred_check_branch
    %16 = sbr.rel (0) target = $region9
  $region8: #{multiple_consistency_loss.1} parent=0 // pred_region
    _
  $region9: #{multiple_consistency_loss.1} parent=0 // pred_fallthru
    _
  // Predicated region
  $region10: #{multiple_consistency_loss.1} parent=0 // pred_check
    _
  $region11: #{multiple_consistency_loss.1} parent=0 // pred_check_branch
    %18 = sbr.rel (0) target = $region13
  $region12: #{multiple_consistency_loss.1} parent=0 // pred_region
    _
  $region13: #{multiple_consistency_loss.1} parent=0 // pred_fallthru
    _
  // Predicated region
  $region14: #{multiple_consistency_loss.1} parent=0 // pred_check
    _
  $region15: #{multiple_consistency_loss.1} parent=0 // pred_check_branch
    %20 = sbr.rel (0) target = $region17
  $region16: #{multiple_consistency_loss.1} parent=0 // pred_region
    _
  $region17: #{multiple_consistency_loss.1} parent=0 // pred_fallthru
    _
  // Predicated region
  $region18: #{multiple_consistency_loss.1} parent=0 // pred_check
    _
  $region19: #{multiple_consistency_loss.1} parent=0 // pred_check_branch
    %22 = sbr.rel (0) target = $region21
  $region20: #{multiple_consistency_loss.1} parent=0 // pred_region
    _
  $region21: #{multiple_consistency_loss.1} parent=0 // pred_fallthru
    _
  // Predicated region
  $region22: #{multiple_consistency_loss.1} parent=0 // pred_check
    _
  $region23: #{multiple_consistency_loss.1} parent=0 // pred_check_branch
    %24 = sbr.rel (0) target = $region25
  $region24: #{multiple_consistency_loss.1} parent=0 // pred_region
    _
  $region25: #{multiple_consistency_loss.1} parent=0 // pred_fallthru
    _
  // Predicated region
  $region26: #{multiple_consistency_loss.1} parent=0 // pred_check
    _
  $region27: #{multiple_consistency_loss.1} parent=0 // pred_check_branch
    %26 = sbr.rel (0) target = $region29
  $region28: #{multiple_consistency_loss.1} parent=0 // pred_region
    _
  $region29: #{multiple_consistency_loss.1} parent=0 // pred_fallthru
    _
  // Predicated region
  $region30: #{multiple_consistency_loss.1} parent=0 // pred_check
    _
  $region31: #{multiple_consistency_loss.1} parent=0 // pred_check_branch
    %28 = sbr.rel (0) target = $region33
  $region32: #{multiple_consistency_loss.1} parent=0 // pred_region
    _
  $region33: #{multiple_consistency_loss.1} parent=0 // pred_fallthru
    _
  %p29 = scmp.eq.s32.totalorder 0, 0
  // Predicated region
  $region34: #{multiple_consistency_loss.1} parent=0 // pred_check
    %p30 = pneg %p29
  $region35: #{multiple_consistency_loss.1} parent=0 // pred_check_branch
    %32 = sbr.rel (%p30) target = $region37
  $region36: #{multiple_consistency_loss.1} parent=0 // pred_region
    %33 = vst [vmem:[%s8] sm:$0xff] 0.0
  $region37: #{multiple_consistency_loss.1} parent=0 // pred_fallthru
    _
  %v34 = vld [vmem:[%s0] sm:$0xff]
  %v35 = vld [vmem:[%s1] sm:$0xff]
  %v36 = vld [vmem:[%s1 + $0x8] sm:$0xff]
  %v37 = vld [vmem:[%s1 + $0x10] sm:$0xff]
  %v38 = vld [vmem:[%s1 + $0x18] sm:$0xff]
  %v39 = vld [vmem:[%s1 + $0x20] sm:$0xff]
  %v40 = vld [vmem:[%s1 + $0x28] sm:$0xff]
  %v41 = vld [vmem:[%s1 + $0x30] sm:$0xff]
  %v42 = vld [vmem:[%s1 + $0x38] sm:$0xff]
  %v43 = vld [vmem:[%s1 + $0x40] sm:$0xff]
  %v44 = vld [vmem:[%s1 + $0x48] sm:$0xff]
  %v45 = vld [vmem:[%s1 + $0x50] sm:$0xff]
  %v46 = vld [vmem:[%s1 + $0x58] sm:$0xff]
  %v47 = vld [vmem:[%s1 + $0x60] sm:$0xff]
  %v48 = vld [vmem:[%s1 + $0x68] sm:$0xff]
  %v49 = vld [vmem:[%s1 + $0x70] sm:$0xff]
  %v50 = vld [vmem:[%s1 + $0x78] sm:$0xff]
  %51 = vmatprep.subr.mxu0 0.0
  %52 = vmatpush1.xpose.msra.mxu0 %v35
  %53 = vmatprep.subr.mxu0 0.0
  %54 = vmatpush1.xpose.msra.mxu0 %v36
  %55 = vmatprep.subr.mxu0 0.0
  %56 = vmatpush1.xpose.msra.mxu0 %v37
  %57 = vmatprep.subr.mxu0 0.0
  %58 = vmatpush1.xpose.msra.mxu0 %v38
  %59 = vmatprep.subr.mxu0 0.0
  %60 = vmatpush1.xpose.msra.mxu0 %v39
  %61 = vmatprep.subr.mxu0 0.0
  %62 = vmatpush1.xpose.msra.mxu0 %v40
  %63 = vmatprep.subr.mxu0 0.0
  %64 = vmatpush1.xpose.msra.mxu0 %v41
  %65 = vmatprep.subr.mxu0 0.0
  %66 = vmatpush1.xpose.msra.mxu0 %v42
  %67 = vmatprep.subr.mxu0 0.0
  %68 = vmatpush1.xpose.msra.mxu0 %v43
  %69 = vmatprep.subr.mxu0 0.0
  %70 = vmatpush1.xpose.msra.mxu0 %v44
  %71 = vmatprep.subr.mxu0 0.0
  %72 = vmatpush1.xpose.msra.mxu0 %v45
  %73 = vmatprep.subr.mxu0 0.0
  %74 = vmatpush1.xpose.msra.mxu0 %v46
  %75 = vmatprep.subr.mxu0 0.0
  %76 = vmatpush1.xpose.msra.mxu0 %v47
  %77 = vmatprep.subr.mxu0 0.0
  %78 = vmatpush1.xpose.msra.mxu0 %v48
  %79 = vmatprep.subr.mxu0 0.0
  %80 = vmatpush1.xpose.msra.mxu0 %v49
  %81 = vmatprep.subr.mxu0 0.0
  %82 = vmatpush1.xpose.msra.mxu0 %v50
  %83 = vmatprep.subr.mxu0 0.0
  %84 = vmatpush1.xpose.msra.mxu0 0.0
  %85 = vmatprep.subr.mxu0 0.0
  %86 = vmatpush1.xpose.msra.mxu0 0.0
  %87 = vmatprep.subr.mxu0 0.0
  %88 = vmatpush1.xpose.msra.mxu0 0.0
  %89 = vmatprep.subr.mxu0 0.0
  %90 = vmatpush1.xpose.msra.mxu0 0.0
  %91 = vmatprep.subr.mxu0 0.0
  %92 = vmatpush1.xpose.msra.mxu0 0.0
  %93 = vmatprep.subr.mxu0 0.0
  %94 = vmatpush1.xpose.msra.mxu0 0.0
  %95 = vmatprep.subr.mxu0 0.0
  %96 = vmatpush1.xpose.msra.mxu0 0.0
  %97 = vmatprep.subr.mxu0 0.0
  %98 = vmatpush1.xpose.msra.mxu0 0.0
  %99 = vmatprep.subr.mxu0 0.0
  %100 = vmatpush1.xpose.msra.mxu0 0.0
  %101 = vmatprep.subr.mxu0 0.0
  %102 = vmatpush1.xpose.msra.mxu0 0.0
  %103 = vmatprep.subr.mxu0 0.0
  %104 = vmatpush1.xpose.msra.mxu0 0.0
  %105 = vmatprep.subr.mxu0 0.0
  %106 = vmatpush1.xpose.msra.mxu0 0.0
  %107 = vmatprep.subr.mxu0 0.0
  %108 = vmatpush1.xpose.msra.mxu0 0.0
  %109 = vmatprep.subr.mxu0 0.0
  %110 = vmatpush1.xpose.msra.mxu0 0.0
  %111 = vmatprep.subr.mxu0 0.0
  %112 = vmatpush1.xpose.msra.mxu0 0.0
  %113 = vmatprep.subr.mxu0 0.0
  %114 = vmatpush1.xpose.msra.mxu0 0.0
  %115 = vmatprep.mubr.f32.mxu0 0.0
  %116 = vmatmul.mubr.f32.gmra.mrb[0].mxu0 %v34
  %v117 = vpop.f32.mrb[0].mxu0
  %v118 = vadd.f32 0.0, %v117
  %v119 = vpop.f32.mrb[0].mxu0
  %120 = vdwg.mxu0
  %v121 = vld [vmem:[%s2] sm:$0xff]
  %v122 = vld [vmem:[%s3] sm:$0xff]
  %v123 = vld [vmem:[%s3 + $0x8] sm:$0xff]
  %v124 = vld [vmem:[%s3 + $0x10] sm:$0xff]
  %v125 = vld [vmem:[%s3 + $0x18] sm:$0xff]
  %v126 = vld [vmem:[%s3 + $0x20] sm:$0xff]
  %v127 = vld [vmem:[%s3 + $0x28] sm:$0xff]
  %v128 = vld [vmem:[%s3 + $0x30] sm:$0xff]
  %v129 = vld [vmem:[%s3 + $0x38] sm:$0xff]
  %v130 = vld [vmem:[%s3 + $0x40] sm:$0xff]
  %v131 = vld [vmem:[%s3 + $0x48] sm:$0xff]
  %v132 = vld [vmem:[%s3 + $0x50] sm:$0xff]
  %v133 = vld [vmem:[%s3 + $0x58] sm:$0xff]
  %v134 = vld [vmem:[%s3 + $0x60] sm:$0xff]
  %v135 = vld [vmem:[%s3 + $0x68] sm:$0xff]
  %v136 = vld [vmem:[%s3 + $0x70] sm:$0xff]
  %v137 = vld [vmem:[%s3 + $0x78] sm:$0xff]
  %138 = vmatprep.subr.mxu0 0.0
  %139 = vmatpush1.xpose.msra.mxu0 %v122
  %140 = vmatprep.subr.mxu0 0.0
  %141 = vmatpush1.xpose.msra.mxu0 %v123
  %142 = vmatprep.subr.mxu0 0.0
  %143 = vmatpush1.xpose.msra.mxu0 %v124
  %144 = vmatprep.subr.mxu0 0.0
  %145 = vmatpush1.xpose.msra.mxu0 %v125
  %146 = vmatprep.subr.mxu0 0.0
  %147 = vmatpush1.xpose.msra.mxu0 %v126
  %148 = vmatprep.subr.mxu0 0.0
  %149 = vmatpush1.xpose.msra.mxu0 %v127
  %150 = vmatprep.subr.mxu0 0.0
  %151 = vmatpush1.xpose.msra.mxu0 %v128
  %152 = vmatprep.subr.mxu0 0.0
  %153 = vmatpush1.xpose.msra.mxu0 %v129
  %154 = vmatprep.subr.mxu0 0.0
  %155 = vmatpush1.xpose.msra.mxu0 %v130
  %156 = vmatprep.subr.mxu0 0.0
  %157 = vmatpush1.xpose.msra.mxu0 %v131
  %158 = vmatprep.subr.mxu0 0.0
  %159 = vmatpush1.xpose.msra.mxu0 %v132
  %160 = vmatprep.subr.mxu0 0.0
  %161 = vmatpush1.xpose.msra.mxu0 %v133
  %162 = vmatprep.subr.mxu0 0.0
  %163 = vmatpush1.xpose.msra.mxu0 %v134
  %164 = vmatprep.subr.mxu0 0.0
  %165 = vmatpush1.xpose.msra.mxu0 %v135
  %166 = vmatprep.subr.mxu0 0.0
  %167 = vmatpush1.xpose.msra.mxu0 %v136
  %168 = vmatprep.subr.mxu0 0.0
  %169 = vmatpush1.xpose.msra.mxu0 %v137
  %170 = vmatprep.subr.mxu0 0.0
  %171 = vmatpush1.xpose.msra.mxu0 0.0
  %172 = vmatprep.subr.mxu0 0.0
  %173 = vmatpush1.xpose.msra.mxu0 0.0
  %174 = vmatprep.subr.mxu0 0.0
  %175 = vmatpush1.xpose.msra.mxu0 0.0
  %176 = vmatprep.subr.mxu0 0.0
  %177 = vmatpush1.xpose.msra.mxu0 0.0
  %178 = vmatprep.subr.mxu0 0.0
  %179 = vmatpush1.xpose.msra.mxu0 0.0
  %180 = vmatprep.subr.mxu0 0.0
  %181 = vmatpush1.xpose.msra.mxu0 0.0
  %182 = vmatprep.subr.mxu0 0.0
  %183 = vmatpush1.xpose.msra.mxu0 0.0
  %184 = vmatprep.subr.mxu0 0.0
  %185 = vmatpush1.xpose.msra.mxu0 0.0
  %186 = vmatprep.subr.mxu0 0.0
  %187 = vmatpush1.xpose.msra.mxu0 0.0
  %188 = vmatprep.subr.mxu0 0.0
  %189 = vmatpush1.xpose.msra.mxu0 0.0
  %190 = vmatprep.subr.mxu0 0.0
  %191 = vmatpush1.xpose.msra.mxu0 0.0
  %192 = vmatprep.subr.mxu0 0.0
  %193 = vmatpush1.xpose.msra.mxu0 0.0
  %194 = vmatprep.subr.mxu0 0.0
  %195 = vmatpush1.xpose.msra.mxu0 0.0
  %196 = vmatprep.subr.mxu0 0.0
  %197 = vmatpush1.xpose.msra.mxu0 0.0
  %198 = vmatprep.subr.mxu0 0.0
  %199 = vmatpush1.xpose.msra.mxu0 0.0
  %200 = vmatprep.subr.mxu0 0.0
  %201 = vmatpush1.xpose.msra.mxu0 0.0
  %202 = vmatprep.mubr.f32.mxu0 0.0
  %203 = vmatmul.mubr.f32.gmra.mrb[0].mxu0 %v121
  %v204 = vpop.f32.mrb[0].mxu0
  %v205 = vadd.f32 0.0, %v204
  %v206 = vpop.f32.mrb[0].mxu0
  %207 = vdwg.mxu0
  %v208 = vld [vmem:[%s4] sm:$0xff]
  %210 = vset.pattern.permute.xlu0 0
  %211 = vperm.xlu0 %210, %v208
  %v212 = vpop.permute.xlu0 %211
  %v214 = vmul.f32 %v118, %v212
  %v215 = vld [vmem:[%s6] sm:$0x1]
  %v217 = vlaneseq
  %v218 = vshrl.u32 %v217, 7
  %v219 = vsub.s32 0, %v218
  %v220 = vrot.slane %v215, %v219
  %v222 = vmul.f32 %v214, %v220
  %v223 = vld [vmem:[%s5] sm:$0xff]
  %225 = vset.pattern.permute.xlu0 0
  %226 = vperm.xlu0 %225, %v223
  %v227 = vpop.permute.xlu0 %226
  %v229 = vmul.f32 %v205, %v227
  %v230 = vld [vmem:[%s7] sm:$0x1]
  %v232 = vlaneseq
  %v233 = vshrl.u32 %v232, 7
  %v234 = vsub.s32 0, %v233
  %v235 = vrot.slane %v230, %v234
  %v237 = vmul.f32 %v229, %v235
  %v238 = vsub.f32 %v222, %v237
  %v239 = vmul.f32 %v238, %v238
  %v240 = vld [vmem:[%s8] sm:$0xff]
  %v241 = vadd.f32 %v239, 0.0
  %v242 = vadd.f32 %v240, %v241
  %243 = vst [vmem:[%s8] sm:$0xff] %v242
  // Predicated region
  $region38: #{multiple_consistency_loss.1} parent=0 // pred_check
    _
  $region39: #{multiple_consistency_loss.1} parent=0 // pred_check_branch
    %245 = sbr.rel (0) target = $region41
  $region40: #{multiple_consistency_loss.1} parent=0 // pred_region
    _
  $region41: #{multiple_consistency_loss.1} parent=0 // pred_fallthru
    _
  // Predicated region
  $region42: #{multiple_consistency_loss.1} parent=0 // pred_check
    _
  $region43: #{multiple_consistency_loss.1} parent=0 // pred_check_branch
    %247 = sbr.rel (0) target = $region45
  $region44: #{multiple_consistency_loss.1} parent=0 // pred_region
    _
  $region45: #{multiple_consistency_loss.1} parent=0 // pred_fallthru
    _

</llo_original>
